<compile_context>
chip_gen: v7x
topology: tpu7x:2x2x1
jax: 0.10.0
libtpu: 0.0.40
codegen_flags: <defaults>
</compile_context>

<pallas_src>
import jax
import jax.numpy as jnp
import numpy as np
from jax.experimental import pallas as pl
from jax.experimental.pallas import tpu as pltpu


def _round_up(x, m):
    return (x + m - 1) // m * m


# ---------------------------------------------------------------------------
# Interpolation-weight construction (pure JAX, outside the kernels).
# Semantics: affine_grid(align_corners=True) base grid, rotation matrix
# [[cos, -sin, 0], [sin, cos, 0]], grid_sample(bilinear, zeros padding,
# align_corners=False) -- exactly matching the PyTorch rot_img().
# ---------------------------------------------------------------------------
def _interp_matrix_1d(scale, size):
    """1-D bilinear sampling matrix T of shape (size_in, size_out), zeros
    padding, such that out[c_out] = sum_in T[in, c_out] * x[in]."""
    c = jnp.arange(size, dtype=jnp.float32)
    g = jnp.float32(scale) * (2.0 * c / (size - 1) - 1.0)   # affine_grid, a_c=True
    ic = ((g + 1.0) * size - 1.0) * 0.5                     # grid_sample, a_c=False
    i0 = jnp.floor(ic)
    i1 = i0 + 1.0
    w1 = ic - i0
    w0 = 1.0 - w1

    def tap(idx_f, w):
        inb = (idx_f >= 0.0) & (idx_f <= size - 1.0)
        idx = jnp.clip(idx_f, 0.0, size - 1.0).astype(jnp.int32)
        onehot = jax.nn.one_hot(idx, size, dtype=jnp.float32)   # (out, in)
        return (onehot * (w * inb)[:, None]).T                  # (in, out)

    return tap(i0, w0) + tap(i1, w1)


def _dense_sample_matrix(theta, H, W):
    """General-theta (H*W, H*W) matrix Mt with out_flat = x_flat @ Mt.
    Built in plain JAX (never inside the kernel); small images only."""
    ct = jnp.cos(jnp.float32(theta))
    st = jnp.sin(jnp.float32(theta))
    h = jnp.arange(H, dtype=jnp.float32)
    w = jnp.arange(W, dtype=jnp.float32)
    xn, yn = jnp.meshgrid(2.0 * w / (W - 1) - 1.0,
                          2.0 * h / (H - 1) - 1.0, indexing="xy")   # (H, W)
    gx = ct * xn - st * yn
    gy = st * xn + ct * yn
    ix = ((gx + 1.0) * W - 1.0) * 0.5
    iy = ((gy + 1.0) * H - 1.0) * 0.5
    x0 = jnp.floor(ix); x1 = x0 + 1.0
    y0 = jnp.floor(iy); y1 = y0 + 1.0
    wx1 = ix - x0; wx0 = 1.0 - wx1
    wy1 = iy - y0; wy0 = 1.0 - wy1
    HW = H * W

    def tap(xc, yc, wgt):
        inb = (xc >= 0) & (xc <= W - 1) & (yc >= 0) & (yc <= H - 1)
        xi = jnp.clip(xc, 0, W - 1).astype(jnp.int32)
        yi = jnp.clip(yc, 0, H - 1).astype(jnp.int32)
        q = (yi * W + xi).reshape(-1)               # input flat index per output pixel
        wcol = (wgt * inb).reshape(-1)
        return (jax.nn.one_hot(q, HW, dtype=jnp.float32) * wcol[:, None]).T

    return (tap(x0, y0, wx0 * wy0) + tap(x1, y0, wx1 * wy0)
            + tap(x0, y1, wx0 * wy1) + tap(x1, y1, wx1 * wy1))


# ---------------------------------------------------------------------------
# Fused separable kernel: per (n, c) image  out = Ah^T @ (img @ Aw).
# Aw (W, W) and Ah^T (H, H) stay resident in VMEM across the whole grid.
# One HBM read of the image, one HBM write of the result; no intermediates.
# ---------------------------------------------------------------------------
def _rot_sep_kernel(x_ref, aht_ref, aw_ref, o_ref):
    img = x_ref[0]                                                    # (H, W)
    tmp = jnp.dot(img, aw_ref[...], preferred_element_type=jnp.float32)
    out = jnp.dot(aht_ref[...], tmp, preferred_element_type=jnp.float32)
    o_ref[0] = out.astype(o_ref.dtype)


def _rot_img_separable(x, ct):
    N, C, H, W = x.shape
    aw = _interp_matrix_1d(ct, W)            # (W_in, W_out)
    aht = _interp_matrix_1d(ct, H).T         # (H_out, H_in)
    xf = x.reshape(N * C, H, W)
    out = pl.pallas_call(
        _rot_sep_kernel,
        out_shape=jax.ShapeDtypeStruct((N * C, H, W), x.dtype),
        grid=(N * C,),
        in_specs=[
            pl.BlockSpec((1, H, W), lambda i: (i, 0, 0)),   # one image per step
            pl.BlockSpec((H, H), lambda i: (0, 0)),         # Ah^T resident
            pl.BlockSpec((W, W), lambda i: (0, 0)),         # Aw   resident
        ],
        out_specs=pl.BlockSpec((1, H, W), lambda i: (i, 0, 0)),
        compiler_params=pltpu.CompilerParams(
            dimension_semantics=("parallel",)),
    )(xf, aht, aw)
    return out.reshape(N, C, H, W)


# ---------------------------------------------------------------------------
# Tiled accumulating matmul (general-theta fallback only):
#   O(M, N) = A(M, K) @ B(K, N), grid (M/tm, N/tn, K/tk), f32 VMEM accumulator.
# ---------------------------------------------------------------------------
def _matmul_acc_kernel(a_ref, b_ref, o_ref, acc_ref):
    @pl.when(pl.program_id(2) == 0)
    def _():
        acc_ref[...] = jnp.zeros_like(acc_ref)

    acc_ref[...] += jnp.dot(a_ref[...], b_ref[...],
                            preferred_element_type=jnp.float32)

    @pl.when(pl.program_id(2) == pl.num_programs(2) - 1)
    def _():
        o_ref[...] = acc_ref[...].astype(o_ref.dtype)


def _pallas_matmul(a, b, *, tm=256, tn=512, tk=512):
    """a: (M, K) f32, b: (K, N) f32 -> (M, N) f32. Fallback path only."""
    M, K = a.shape
    K2, Nn = b.shape
    assert K == K2
    tm = min(tm, _round_up(M, 8))
    tk = K if K <= tk else tk
    tn = Nn if Nn <= tn else tn
    # Zero-pad the contraction / lane dims so every tile is dense.  This is
    # the rarely-used fallback path; the hot separable path never pads.
    Kp = _round_up(K, tk)
    Np = _round_up(Nn, tn)
    if Kp != K:
        a = jnp.pad(a, ((0, 0), (0, Kp - K)))
        b = jnp.pad(b, ((0, Kp - K), (0, 0)))
    if Np != Nn:
        b = jnp.pad(b, ((0, 0), (0, Np - Nn)))

    grid = (pl.cdiv(M, tm), Np // tn, Kp // tk)
    out = pl.pallas_call(
        _matmul_acc_kernel,
        out_shape=jax.ShapeDtypeStruct((M, Np), a.dtype),
        grid=grid,
        in_specs=[
            pl.BlockSpec((tm, tk), lambda i, j, k: (i, k)),
            pl.BlockSpec((tk, tn), lambda i, j, k: (k, j)),
        ],
        out_specs=pl.BlockSpec((tm, tn), lambda i, j, k: (i, j)),
        scratch_shapes=[pltpu.VMEM((tm, tn), jnp.float32)],
        compiler_params=pltpu.CompilerParams(
            dimension_semantics=("parallel", "parallel", "arbitrary")),
    )(a, b)
    return out[:, :Nn]


# ---------------------------------------------------------------------------
# rot_img equivalent
# ---------------------------------------------------------------------------
def rot_img_pallas(x, theta):
    """Equivalent of rot_img(x, theta, dtype) for NCHW float32 x."""
    N, C, H, W = x.shape
    ct = float(np.cos(theta))
    st = float(np.sin(theta))

    if abs(st) < 1e-6:
        # Separable path -- covers the actual Reconstructor call rot_img(evs, pi).
        return _rot_img_separable(x, ct)

    # General (non-axis-aligned) theta: dense sampling matrix precomputed in
    # JAX, tiled accumulating matmul in the kernel.  Small images only.
    if H * W > 4096:
        # TODO(synk): for full-resolution DVS frames with a general theta,
        # implement a scalar-prefetch row-gather kernel (2 source rows per
        # output row DMA'd into VMEM + 4-tap VPU blend) instead.
        raise NotImplementedError(
            "general-theta rot_img builds a dense (H*W, H*W) matrix; "
            "only supported for H*W <= 4096 (got H*W = %d)" % (H * W))
    mt = _dense_sample_matrix(theta, H, W)                  # (HW, HW)
    y = _pallas_matmul(x.reshape(N * C, H * W), mt)
    return y.reshape(N, C, H, W)


# ---------------------------------------------------------------------------
# Pure-JAX reference (gather-based) with identical PyTorch semantics.
# ---------------------------------------------------------------------------
def _rot_img_reference(x, theta):
    N, C, H, W = x.shape
    ct = jnp.cos(jnp.float32(theta))
    st = jnp.sin(jnp.float32(theta))
    w_idx = jnp.arange(W, dtype=jnp.float32)
    h_idx = jnp.arange(H, dtype=jnp.float32)
    xn = 2.0 * w_idx / (W - 1) - 1.0
    yn = 2.0 * h_idx / (H - 1) - 1.0
    xn, yn = jnp.meshgrid(xn, yn, indexing="xy")            # (H, W)
    gx = ct * xn + (-st) * yn
    gy = st * xn + ct * yn
    ix = ((gx + 1.0) * W - 1.0) * 0.5
    iy = ((gy + 1.0) * H - 1.0) * 0.5
    x0 = jnp.floor(ix); x1 = x0 + 1.0
    y0 = jnp.floor(iy); y1 = y0 + 1.0
    wx1 = ix - x0; wx0 = 1.0 - wx1
    wy1 = iy - y0; wy0 = 1.0 - wy1

    def tap(xc, yc, wgt):
        inb = (xc >= 0) & (xc <= W - 1) & (yc >= 0) & (yc <= H - 1)
        xi = jnp.clip(xc, 0, W - 1).astype(jnp.int32)
        yi = jnp.clip(yc, 0, H - 1).astype(jnp.int32)
        vals = x[:, :, yi, xi]                               # (N, C, H, W)
        return vals * (wgt * inb.astype(x.dtype))[None, None]

    return (tap(x0, y0, wx0 * wy0) + tap(x1, y0, wx1 * wy0)
            + tap(x0, y1, wx0 * wy1) + tap(x1, y1, wx1 * wy1))


if __name__ == "__main__":
    # Event-voxel-like input (Reconstructor uses (1, num_bins, H, W); small
    # demo shapes here).
    key = jax.random.PRNGKey(0)
    N, C, H, W = 2, 4, 16, 16
    evs = jax.random.normal(key, (N, C, H, W), dtype=jnp.float32)

    # Main Reconstructor path: dvs == 'samsung'  ->  rot_img(evs, np.pi).
    theta = float(np.pi)
    out = jax.block_until_ready(rot_img_pallas(evs, theta))
    ref = _rot_img_reference(evs, theta)
    np.testing.assert_allclose(np.asarray(out), np.asarray(ref),
                               rtol=2e-5, atol=2e-5)

    # General-theta fallback (small image, dense precomputed matrix).
    theta2 = 0.3
    out2 = jax.block_until_ready(rot_img_pallas(evs, theta2))
    ref2 = _rot_img_reference(evs, theta2)
    np.testing.assert_allclose(np.asarray(out2), np.asarray(ref2),
                               rtol=2e-5, atol=2e-5)

    # TODO(synk): file/event readers, checkpoint loading, image/flow writers
    # and the CISTA sub-networks (DCEIFlowCistaNet / ERAFTCistaNet) are
    # external host-side code, not translatable to a Pallas kernel.
    print("KERNEL_OK")
</pallas_src>

<mosaic_0001>
module attributes {stable_mosaic.version = 11 : i64} {
  func.func @_rot_sep_kernel(%arg0: i32, %arg1: memref<1x16x16xf32, #tpu.memory_space<vmem>>, %arg2: memref<16x16xf32, #tpu.memory_space<vmem>>, %arg3: memref<16x16xf32, #tpu.memory_space<vmem>>, %arg4: memref<1x16x16xf32, #tpu.memory_space<vmem>>) attributes {dimension_semantics = [#tpu.dimension_semantics<parallel>], iteration_bounds = array<i64: 8>, scalar_prefetch = 0 : i64, scratch_operands = 0 : i64, tpu.core_type = #tpu.core_type<tc>, window_params = [{transform_indices = @transform_0, window_bounds = array<i64: 1, 16, 16>}, {pipeline_mode = #tpu.pipeline_mode<synchronous>, transform_indices = @transform_1, window_bounds = array<i64: 16, 16>}, {pipeline_mode = #tpu.pipeline_mode<synchronous>, transform_indices = @transform_2, window_bounds = array<i64: 16, 16>}, {transform_indices = @transform_3, window_bounds = array<i64: 1, 16, 16>}]} {
    %c0 = arith.constant 0 : index
    %c0_0 = arith.constant 0 : index
    %c0_1 = arith.constant 0 : index
    %0 = vector.load %arg1[%c0, %c0_0, %c0_1] : memref<1x16x16xf32, #tpu.memory_space<vmem>>, vector<1x16x16xf32>
    %1 = vector.shape_cast %0 : vector<1x16x16xf32> to vector<16x16xf32>
    %c0_2 = arith.constant 0 : index
    %c0_3 = arith.constant 0 : index
    %2 = vector.load %arg3[%c0_2, %c0_3] : memref<16x16xf32, #tpu.memory_space<vmem>>, vector<16x16xf32>
    %cst = arith.constant dense<0.000000e+00> : vector<16x16xf32>
    %3 = tpu.matmul %1, %2, %cst {dimension_numbers = #tpu.dot_dimension_numbers<[1], [0], [0], [1], [0, 0, 1, 1], [], []>} : vector<16x16xf32>, vector<16x16xf32>, vector<16x16xf32> -> vector<16x16xf32>
    %c0_4 = arith.constant 0 : index
    %c0_5 = arith.constant 0 : index
    %4 = vector.load %arg2[%c0_4, %c0_5] : memref<16x16xf32, #tpu.memory_space<vmem>>, vector<16x16xf32>
    %cst_6 = arith.constant dense<0.000000e+00> : vector<16x16xf32>
    %5 = tpu.matmul %4, %3, %cst_6 {dimension_numbers = #tpu.dot_dimension_numbers<[1], [0], [0], [1], [0, 0, 1, 1], [], []>} : vector<16x16xf32>, vector<16x16xf32>, vector<16x16xf32> -> vector<16x16xf32>
    %c0_7 = arith.constant 0 : index
    %c0_8 = arith.constant 0 : index
    %c0_9 = arith.constant 0 : index
    %6 = vector.load %arg4[%c0_7, %c0_8, %c0_9] : memref<1x16x16xf32, #tpu.memory_space<vmem>>, vector<1x16x16xf32>
    %7 = vector.shape_cast %6 : vector<1x16x16xf32> to vector<16x16xf32>
    %8 = vector.shape_cast %5 : vector<16x16xf32> to vector<1x16x16xf32>
    tpu.vector_store %arg4[%c0_7, %c0_8, %c0_9], %8 {strides = array<i32>} : memref<1x16x16xf32, #tpu.memory_space<vmem>>, vector<1x16x16xf32>,
    return
  }
  func.func @transform_0(%arg0: i32) -> (i32, i32, i32) {
    %c0_i32 = arith.constant 0 : i32
    %c0_i32_0 = arith.constant 0 : i32
    %c0_i32_1 = arith.constant 0 : i32
    return %arg0, %c0_i32, %c0_i32_0 : i32, i32, i32
  }
  func.func @transform_1(%arg0: i32) -> (i32, i32) {
    %c0_i32 = arith.constant 0 : i32
    %c0_i32_0 = arith.constant 0 : i32
    %c0_i32_1 = arith.constant 0 : i32
    return %c0_i32, %c0_i32_0 : i32, i32
  }
  func.func @transform_2(%arg0: i32) -> (i32, i32) {
    %c0_i32 = arith.constant 0 : i32
    %c0_i32_0 = arith.constant 0 : i32
    %c0_i32_1 = arith.constant 0 : i32
    return %c0_i32, %c0_i32_0 : i32, i32
  }
  func.func @transform_3(%arg0: i32) -> (i32, i32, i32) {
    %c0_i32 = arith.constant 0 : i32
    %c0_i32_0 = arith.constant 0 : i32
    %c0_i32_1 = arith.constant 0 : i32
    return %arg0, %c0_i32, %c0_i32_0 : i32, i32, i32
  }
}

</mosaic_0001>

<llo_original>
// kernel: tpu_custom_call.1
$region0: #{tpu_custom_call.1}
  #allocation0 [shape = 'u32[]', space=smem, size = 0x4, offset = 0x4, fixed_abs, tag = 'smem constant byte address 0x4 - core index']
  #allocation1 [shape = 'u32[144,128]{1,0:T(1,128)}', space=vmem, size = 0x12000, scoped, tag = 'internal scratch']
  %s0 = inlined_call_operand.hbm [shape: f32[8,16,16], index: 0, kind: input, shape index: {}]
  %s1 = inlined_call_operand.hbm [shape: f32[16,16], index: 1, kind: input, shape index: {}]
  %s2 = inlined_call_operand.hbm [shape: f32[16,16], index: 2, kind: input, shape index: {}]
  %s3 = inlined_call_operand.hbm [shape: f32[8,16,16], index: 3, kind: output, shape index: {}]
  %s4 = sld [smem:[#allocation0]]
  $region57: #{tpu_custom_call.1} parent=0
    _
  %s6 = ssub.s32 1, %s4
  %s7 = scalar_select 0, %s6, %s4
  $region1: #{tpu_custom_call.1} parent=0
    #allocation2 [shape = 'u8[16384]{0}', space=vmem, size = 0x4000, scoped, tag = 'input window, operand 0']
    #allocation3 [shape = 's32[2]{0}', space=sflag, size = 0x8, scoped, tag = 'scoped memory for tpu_custom_call.1']
    #allocation4 [shape = 's32[2]{0}', space=sflag, size = 0x8, scoped, tag = 'scoped memory for tpu_custom_call.1']
    #allocation5 [shape = 'u8[8192]{0}', space=vmem, size = 0x2000, scoped, tag = 'input window, operand 1, single buffered']
    #allocation6 [shape = 's32[1]{0}', space=sflag, size = 0x4, scoped, tag = 'scoped memory for tpu_custom_call.1']
    #allocation7 [shape = 'u8[8192]{0}', space=vmem, size = 0x2000, scoped, tag = 'input window, operand 2, single buffered']
    #allocation8 [shape = 'u8[16384]{0}', space=vmem, size = 0x4000, scoped, tag = 'output window, operand 0']
    %8 = vsyncpa [#allocation3], 0
    %s9 = scalar_lea.sflag [#allocation3], 1
    %10 = vsyncpa %s9, 0
    %11 = vsyncpa [#allocation6], 0
    %12 = vsyncpa [#allocation4], 0
    %s13 = scalar_lea.sflag [#allocation4], 1
    %14 = vsyncpa %s13, 0
    loop: start=0, step=1, limit=10
    $region2: #{tpu_custom_call.1} parent=1 // loop_pre_header
      _
    $region3: #{tpu_custom_call.1} parent=1 // loop_header
      %s16 = sphi 0, %s20
      %p17 = scmp.ge.s32.totalorder %s16, 10
      %s26 = sphi 0, %s28
      %s29 = sphi 0, %s26
      %s30 = sphi 0, %s29
      %s46 = sphi 0, %s30
      %s50 = sphi 0, %s50
      %s52 = sphi 0, %s50
      %s53 = sphi 0, %s52
      %s67 = sphi 0, %s53
      %s71 = sphi 0, %s71
      %s73 = sphi 0, %s71
      %s74 = sphi 0, %s73
      %s88 = sphi 0, %s74
      %s94 = sphi 0, %s96
      %s97 = sphi 0, %s94
      %s98 = sphi 0, %s97
      %s114 = sphi 0, %s98
    $region4: #{tpu_custom_call.1} parent=1 // loop_header_branch
      %19 = sbr.rel (%p17) target = $region8
    $region5: #{tpu_custom_call.1} parent=1 // loop_body
      %s21 = ssub.s32 %s16, 1
      %s22 = ssub.s32 %s16, 2
      %s23 = sadd.s32 %s16, 1
      %s24 = ssub.s32 %s16, %s23
      %p25 = scmp.eq.s32.totalorder %s24, 0
      %s27 = sadd.s32 %s26, 1
      %s28 = scalar_select %p25, %s26, %s27
      %p31 = pneg %p25
      %p32 = scmp.eq.s32.totalorder %s16, 7
      %p33 = por %p31, %p32
      %p34 = scmp.ne.s32.totalorder %s26, %s29
      %p35 = scmp.eq.s32.totalorder %s16, 0
      %p36 = por %p34, %p35
      %p37 = scmp.ne.s32.totalorder %s26, %s29
      %p38 = scmp.eq.s32.totalorder %s21, 7
      %p39 = por %p37, %p38
      %p40 = scmp.ne.s32.totalorder %s29, %s30
      %p41 = scmp.eq.s32.totalorder %s21, 0
      %p42 = por %p40, %p41
      %p43 = scmp.ne.s32.totalorder %s29, %s30
      %p44 = scmp.eq.s32.totalorder %s22, 7
      %p45 = por %p43, %p44
      %p47 = scmp.ne.s32.totalorder %s30, %s46
      %p48 = scmp.eq.s32.totalorder %s22, 0
      %p49 = por %p47, %p48
      %s51 = sadd.s32 %s50, 1
      %p54 = scmp.eq.s32.totalorder %s16, 7
      %p55 = scmp.ne.s32.totalorder %s50, %s52
      %p56 = scmp.eq.s32.totalorder %s16, 0
      %p57 = por %p55, %p56
      %p58 = scmp.ne.s32.totalorder %s50, %s52
      %p59 = scmp.eq.s32.totalorder %s21, 7
      %p60 = por %p58, %p59
      %p61 = scmp.ne.s32.totalorder %s52, %s53
      %p62 = scmp.eq.s32.totalorder %s21, 0
      %p63 = por %p61, %p62
      %p64 = scmp.ne.s32.totalorder %s52, %s53
      %p65 = scmp.eq.s32.totalorder %s22, 7
      %p66 = por %p64, %p65
      %p68 = scmp.ne.s32.totalorder %s53, %s67
      %p69 = scmp.eq.s32.totalorder %s22, 0
      %p70 = por %p68, %p69
      %s72 = sadd.s32 %s71, 1
      %p75 = scmp.eq.s32.totalorder %s16, 7
      %p76 = scmp.ne.s32.totalorder %s71, %s73
      %p77 = scmp.eq.s32.totalorder %s16, 0
      %p78 = por %p76, %p77
      %p79 = scmp.ne.s32.totalorder %s71, %s73
      %p80 = scmp.eq.s32.totalorder %s21, 7
      %p81 = por %p79, %p80
      %p82 = scmp.ne.s32.totalorder %s73, %s74
      %p83 = scmp.eq.s32.totalorder %s21, 0
      %p84 = por %p82, %p83
      %p85 = scmp.ne.s32.totalorder %s73, %s74
      %p86 = scmp.eq.s32.totalorder %s22, 7
      %p87 = por %p85, %p86
      %p89 = scmp.ne.s32.totalorder %s74, %s88
      %p90 = scmp.eq.s32.totalorder %s22, 0
      %p91 = por %p89, %p90
      %s92 = ssub.s32 %s16, %s23
      %p93 = scmp.eq.s32.totalorder %s92, 0
      %s95 = sadd.s32 %s94, 1
      %s96 = scalar_select %p93, %s94, %s95
      %p99 = pneg %p93
      %p100 = scmp.eq.s32.totalorder %s16, 7
      %p101 = por %p99, %p100
      %p102 = scmp.ne.s32.totalorder %s94, %s97
      %p103 = scmp.eq.s32.totalorder %s16, 0
      %p104 = por %p102, %p103
      %p105 = scmp.ne.s32.totalorder %s94, %s97
      %p106 = scmp.eq.s32.totalorder %s21, 7
      %p107 = por %p105, %p106
      %p108 = scmp.ne.s32.totalorder %s97, %s98
      %p109 = scmp.eq.s32.totalorder %s21, 0
      %p110 = por %p108, %p109
      %p111 = scmp.ne.s32.totalorder %s97, %s98
      %p112 = scmp.eq.s32.totalorder %s22, 7
      %p113 = por %p111, %p112
      %p115 = scmp.ne.s32.totalorder %s98, %s114
      %p116 = scmp.eq.s32.totalorder %s22, 0
      %p117 = por %p115, %p116
      %p118 = scmp.le.s32.totalorder 1, %s16
      %p119 = scmp.lt.s32.totalorder %s16, 9
      %p120 = pnand %p118, %p119
      %p121 = pneg %p120
      // Predicated region
      $region9: #{tpu_custom_call.1} parent=5 // pred_check
        _
      $region10: #{tpu_custom_call.1} parent=5 // pred_check_branch
        %123 = sbr.rel (%p120) target = $region12
      $region11: #{tpu_custom_call.1} parent=5 // pred_region
        %s124 = ssub.s32 %s16, 1
        // Predicated region
        $region13: #{tpu_custom_call.1} parent=11 // pred_check
          %p125 = pneg %p63
        $region14: #{tpu_custom_call.1} parent=11 // pred_check_branch
          %127 = sbr.rel (%p125) target = $region16
        $region15: #{tpu_custom_call.1} parent=11 // pred_region
          %s129 = ssub.s32 256, 256
          %130 = vsyncadd [#allocation6], %s129
          %s131 = sshll.u32 [#allocation5], 4
          %s132 = int_to_ptr.vmem [resolvable:$true] %s131
          %137 = dma.hbm_to_vmem [thread:$0]  %s1, 256, %s132, [#allocation6], 128, 128, 8
        $region16: #{tpu_custom_call.1} parent=11 // pred_fallthru
          _
        // Predicated region
        $region17: #{tpu_custom_call.1} parent=11 // pred_check
          %p138 = pneg %p84
        $region18: #{tpu_custom_call.1} parent=11 // pred_check_branch
          %140 = sbr.rel (%p138) target = $region20
        $region19: #{tpu_custom_call.1} parent=11 // pred_region
          %s142 = ssub.s32 256, 256
          %143 = vsyncadd [#allocation6], %s142
          %s144 = sshll.u32 [#allocation7], 4
          %s145 = int_to_ptr.vmem [resolvable:$true] %s144
          %150 = dma.hbm_to_vmem [thread:$0]  %s2, 256, %s145, [#allocation6], 128, 128, 8
        $region20: #{tpu_custom_call.1} parent=11 // pred_fallthru
          _
      $region12: #{tpu_custom_call.1} parent=5 // pred_fallthru
        _
      %p151 = scmp.lt.s32.totalorder %s16, 8
      // Predicated region
      $region21: #{tpu_custom_call.1} parent=5 // pred_check
        %p152 = pneg %p151
      $region22: #{tpu_custom_call.1} parent=5 // pred_check_branch
        %154 = sbr.rel (%p152) target = $region24
      $region23: #{tpu_custom_call.1} parent=5 // pred_region
        // Predicated region
        $region25: #{tpu_custom_call.1} parent=23 // pred_check
          %p155 = pneg %p36
        $region26: #{tpu_custom_call.1} parent=23 // pred_check_branch
          %157 = sbr.rel (%p155) target = $region28
        $region27: #{tpu_custom_call.1} parent=23 // pred_region
          %s158 = sand.u32 %s26, 1
          %s159 = scalar_lea.sflag [#allocation3], %s158
          %s160 = sand.u32 %s26, 1
          %s161 = smul.addr %s160, 16
          %s162 = scalar_lea.vmem [#allocation2], %s161
          %s164 = ssub.s32 256, 256
          %165 = vsyncadd %s159, %s164
          %s166 = smul.addr %s16, 2
          %s167 = smul.addr %s166, 128
          %s168 = scalar_lea.hbm %s0, %s167
          %s169 = sshll.u32 %s162, 4
          %s170 = int_to_ptr.vmem [resolvable:$true] %s169
          %175 = dma.hbm_to_vmem [thread:$0]  %s168, 256, %s170, %s159, 128, 128, 8
        $region28: #{tpu_custom_call.1} parent=23 // pred_fallthru
          _
      $region24: #{tpu_custom_call.1} parent=5 // pred_fallthru
        _
      %p176 = scmp.le.s32.totalorder 1, %s16
      %p177 = scmp.lt.s32.totalorder %s16, 9
      %p178 = pnand %p176, %p177
      %p179 = pneg %p178
      // Predicated region
      $region29: #{tpu_custom_call.1} parent=5 // pred_check
        _
      $region30: #{tpu_custom_call.1} parent=5 // pred_check_branch
        %181 = sbr.rel (%p178) target = $region32
      $region31: #{tpu_custom_call.1} parent=5 // pred_region
        %s182 = ssub.s32 %s16, 1
        %s183 = sand.u32 %s29, 1
        %s184 = scalar_lea.sflag [#allocation3], %s183
        %s185 = sand.u32 %s29, 1
        %s186 = smul.addr %s185, 16
        %s187 = scalar_lea.vmem [#allocation2], %s186
        // Predicated region
        $region33: #{tpu_custom_call.1} parent=31 // pred_check
          %p188 = pneg %p42
        $region34: #{tpu_custom_call.1} parent=31 // pred_check_branch
          %190 = sbr.rel (%p188) target = $region36
        $region35: #{tpu_custom_call.1} parent=31 // pred_region
          %191 = dma.done %s184, 256
        $region36: #{tpu_custom_call.1} parent=31 // pred_fallthru
          _
        // Predicated region
        $region37: #{tpu_custom_call.1} parent=31 // pred_check
          %p192 = pneg %p63
        $region38: #{tpu_custom_call.1} parent=31 // pred_check_branch
          %194 = sbr.rel (%p192) target = $region40
        $region39: #{tpu_custom_call.1} parent=31 // pred_region
          %195 = dma.done [#allocation6], 256
        $region40: #{tpu_custom_call.1} parent=31 // pred_fallthru
          _
        // Predicated region
        $region41: #{tpu_custom_call.1} parent=31 // pred_check
          %p196 = pneg %p84
        $region42: #{tpu_custom_call.1} parent=31 // pred_check_branch
          %198 = sbr.rel (%p196) target = $region44
        $region43: #{tpu_custom_call.1} parent=31 // pred_region
          %199 = dma.done [#allocation6], 256
        $region44: #{tpu_custom_call.1} parent=31 // pred_fallthru
          _
        %s200 = sand.u32 %s29, 1
        %s201 = scalar_lea.sflag [#allocation3], %s200
        %s202 = sand.u32 %s29, 1
        %s203 = smul.addr %s202, 16
        %s204 = scalar_lea.vmem [#allocation2], %s203
        %p205 = pneg %p42
        %p206 = pneg %p39
        %p207 = pneg %p63
        %p208 = pneg %p60
        %p209 = pneg %p84
        %p210 = pneg %p81
        %p211 = pneg %p110
        %p212 = pneg %p107
        %s213 = sand.u32 %s97, 1
        %s214 = scalar_lea.sflag [#allocation4], %s213
        %s215 = sand.u32 %s97, 1
        %s216 = smul.addr %s215, 16
        %s217 = scalar_lea.vmem [#allocation8], %s216
        %v218 = vld [vmem:[%s187] sm:$0xff]
        %v219 = vld [vmem:[%s187 + $0x8] sm:$0xff]
        %v220 = vld [vmem:[#allocation7] sm:$0xff]
        %v221 = vld [vmem:[#allocation7 + $0x8] sm:$0xff]
        %vm222 = vcmask 130048
        %v224 = vsel %vm222, %v218, 0
        %v227 = vsel %vm222, %v219, 0
        %229 = vmatprep.subr.mxu0 0.0
        %230 = vmatpush1.msra.mxu0 %v220
        %231 = vmatprep.subr.mxu0 0.0
        %232 = vmatpush1.msra.mxu0 %v221
        %233 = vmatprep.subr.mxu0 0.0
        %234 = vmatpush1.msra.mxu0 0.0
        %235 = vmatprep.subr.mxu0 0.0
        %236 = vmatpush1.msra.mxu0 0.0
        %237 = vmatprep.subr.mxu0 0.0
        %238 = vmatpush1.msra.mxu0 0.0
        %239 = vmatprep.subr.mxu0 0.0
        %240 = vmatpush1.msra.mxu0 0.0
        %241 = vmatprep.subr.mxu0 0.0
        %242 = vmatpush1.msra.mxu0 0.0
        %243 = vmatprep.subr.mxu0 0.0
        %244 = vmatpush1.msra.mxu0 0.0
        %245 = vmatprep.subr.mxu0 0.0
        %246 = vmatpush1.msra.mxu0 0.0
        %247 = vmatprep.subr.mxu0 0.0
        %248 = vmatpush1.msra.mxu0 0.0
        %249 = vmatprep.subr.mxu0 0.0
        %250 = vmatpush1.msra.mxu0 0.0
        %251 = vmatprep.subr.mxu0 0.0
        %252 = vmatpush1.msra.mxu0 0.0
        %253 = vmatprep.subr.mxu0 0.0
        %254 = vmatpush1.msra.mxu0 0.0
        %255 = vmatprep.subr.mxu0 0.0
        %256 = vmatpush1.msra.mxu0 0.0
        %257 = vmatprep.subr.mxu0 0.0
        %258 = vmatpush1.msra.mxu0 0.0
        %259 = vmatprep.subr.mxu0 0.0
        %260 = vmatpush1.msra.mxu0 0.0
        %261 = vmatprep.subr.mxu0 0.0
        %262 = vmatpush1.msra.mxu0 0.0
        %263 = vmatprep.subr.mxu0 0.0
        %264 = vmatpush1.msra.mxu0 0.0
        %265 = vmatprep.subr.mxu0 0.0
        %266 = vmatpush1.msra.mxu0 0.0
        %267 = vmatprep.subr.mxu0 0.0
        %268 = vmatpush1.msra.mxu0 0.0
        %269 = vmatprep.subr.mxu0 0.0
        %270 = vmatpush1.msra.mxu0 0.0
        %271 = vmatprep.subr.mxu0 0.0
        %272 = vmatpush1.msra.mxu0 0.0
        %273 = vmatprep.subr.mxu0 0.0
        %274 = vmatpush1.msra.mxu0 0.0
        %275 = vmatprep.subr.mxu0 0.0
        %276 = vmatpush1.msra.mxu0 0.0
        %277 = vmatprep.subr.mxu0 0.0
        %278 = vmatpush1.msra.mxu0 0.0
        %279 = vmatprep.subr.mxu0 0.0
        %280 = vmatpush1.msra.mxu0 0.0
        %281 = vmatprep.subr.mxu0 0.0
        %282 = vmatpush1.msra.mxu0 0.0
        %283 = vmatprep.subr.mxu0 0.0
        %284 = vmatpush1.msra.mxu0 0.0
        %285 = vmatprep.subr.mxu0 0.0
        %286 = vmatpush1.msra.mxu0 0.0
        %287 = vmatprep.subr.mxu0 0.0
        %288 = vmatpush1.msra.mxu0 0.0
        %289 = vmatprep.subr.mxu0 0.0
        %290 = vmatpush1.msra.mxu0 0.0
        %291 = vmatprep.subr.mxu0 0.0
        %292 = vmatpush1.msra.mxu0 0.0
        %293 = vmatprep.mubr.f32.mxu0 0.0
        %294 = vmatmul.mubr.f32.gmra.mrb[0].mxu0 %v224
        %v295 = vpop.f32.mrb[0].mxu0
        %v296 = vadd.f32 0.0, %v295
        %v297 = vpop.f32.mrb[0].mxu0
        %298 = vmatprep.mubr.f32.mxu0 0.0
        %299 = vmatmul.mubr.f32.gmra.mrb[0].mxu0 %v227
        %v300 = vpop.f32.mrb[0].mxu0
        %v301 = vadd.f32 0.0, %v300
        %v302 = vpop.f32.mrb[0].mxu0
        %303 = vdwg.mxu0
        %v304 = vld [vmem:[#allocation5] sm:$0xff]
        %v305 = vld [vmem:[#allocation5 + $0x8] sm:$0xff]
        %v307 = vsel %vm222, %v304, 0
        %v310 = vsel %vm222, %v305, 0
        %312 = vmatprep.subr.mxu0 0.0
        %313 = vmatpush1.msra.mxu0 %v296
        %314 = vmatprep.subr.mxu0 0.0
        %315 = vmatpush1.msra.mxu0 %v301
        %316 = vmatprep.subr.mxu0 0.0
        %317 = vmatpush1.msra.mxu0 0.0
        %318 = vmatprep.subr.mxu0 0.0
        %319 = vmatpush1.msra.mxu0 0.0
        %320 = vmatprep.subr.mxu0 0.0
        %321 = vmatpush1.msra.mxu0 0.0
        %322 = vmatprep.subr.mxu0 0.0
        %323 = vmatpush1.msra.mxu0 0.0
        %324 = vmatprep.subr.mxu0 0.0
        %325 = vmatpush1.msra.mxu0 0.0
        %326 = vmatprep.subr.mxu0 0.0
        %327 = vmatpush1.msra.mxu0 0.0
        %328 = vmatprep.subr.mxu0 0.0
        %329 = vmatpush1.msra.mxu0 0.0
        %330 = vmatprep.subr.mxu0 0.0
        %331 = vmatpush1.msra.mxu0 0.0
        %332 = vmatprep.subr.mxu0 0.0
        %333 = vmatpush1.msra.mxu0 0.0
        %334 = vmatprep.subr.mxu0 0.0
        %335 = vmatpush1.msra.mxu0 0.0
        %336 = vmatprep.subr.mxu0 0.0
        %337 = vmatpush1.msra.mxu0 0.0
        %338 = vmatprep.subr.mxu0 0.0
        %339 = vmatpush1.msra.mxu0 0.0
        %340 = vmatprep.subr.mxu0 0.0
        %341 = vmatpush1.msra.mxu0 0.0
        %342 = vmatprep.subr.mxu0 0.0
        %343 = vmatpush1.msra.mxu0 0.0
        %344 = vmatprep.subr.mxu0 0.0
        %345 = vmatpush1.msra.mxu0 0.0
        %346 = vmatprep.subr.mxu0 0.0
        %347 = vmatpush1.msra.mxu0 0.0
        %348 = vmatprep.subr.mxu0 0.0
        %349 = vmatpush1.msra.mxu0 0.0
        %350 = vmatprep.subr.mxu0 0.0
        %351 = vmatpush1.msra.mxu0 0.0
        %352 = vmatprep.subr.mxu0 0.0
        %353 = vmatpush1.msra.mxu0 0.0
        %354 = vmatprep.subr.mxu0 0.0
        %355 = vmatpush1.msra.mxu0 0.0
        %356 = vmatprep.subr.mxu0 0.0
        %357 = vmatpush1.msra.mxu0 0.0
        %358 = vmatprep.subr.mxu0 0.0
        %359 = vmatpush1.msra.mxu0 0.0
        %360 = vmatprep.subr.mxu0 0.0
        %361 = vmatpush1.msra.mxu0 0.0
        %362 = vmatprep.subr.mxu0 0.0
        %363 = vmatpush1.msra.mxu0 0.0
        %364 = vmatprep.subr.mxu0 0.0
        %365 = vmatpush1.msra.mxu0 0.0
        %366 = vmatprep.subr.mxu0 0.0
        %367 = vmatpush1.msra.mxu0 0.0
        %368 = vmatprep.subr.mxu0 0.0
        %369 = vmatpush1.msra.mxu0 0.0
        %370 = vmatprep.subr.mxu0 0.0
        %371 = vmatpush1.msra.mxu0 0.0
        %372 = vmatprep.subr.mxu0 0.0
        %373 = vmatpush1.msra.mxu0 0.0
        %374 = vmatprep.subr.mxu0 0.0
        %375 = vmatpush1.msra.mxu0 0.0
        %376 = vmatprep.mubr.f32.mxu0 0.0
        %377 = vmatmul.mubr.f32.gmra.mrb[0].mxu0 %v307
        %v378 = vpop.f32.mrb[0].mxu0
        %v379 = vadd.f32 0.0, %v378
        %v380 = vpop.f32.mrb[0].mxu0
        %381 = vmatprep.mubr.f32.mxu0 0.0
        %382 = vmatmul.mubr.f32.gmra.mrb[0].mxu0 %v310
        %v383 = vpop.f32.mrb[0].mxu0
        %v384 = vadd.f32 0.0, %v383
        %v385 = vpop.f32.mrb[0].mxu0
        %386 = vdwg.mxu0
        %387 = vst.msk [vmem:[%s217] sm:$0xff] %vm222, %v379
        %388 = vst.msk [vmem:[%s217 + $0x8] sm:$0xff] %vm222, %v384
        %s389 = sand.u32 %s97, 1
        %s390 = scalar_lea.sflag [#allocation4], %s389
        %s391 = sand.u32 %s97, 1
        %s392 = smul.addr %s391, 16
        %s393 = scalar_lea.vmem [#allocation8], %s392
        // Predicated region
        $region45: #{tpu_custom_call.1} parent=31 // pred_check
          %p394 = pneg %p107
        $region46: #{tpu_custom_call.1} parent=31 // pred_check_branch
          %396 = sbr.rel (%p394) target = $region48
        $region47: #{tpu_custom_call.1} parent=31 // pred_region
          %s398 = ssub.s32 256, 256
          %399 = vsyncadd %s390, %s398
          %s400 = smul.addr %s21, 2
          %s401 = smul.addr %s400, 128
          %s402 = scalar_lea.hbm %s3, %s401
          %s403 = sshll.u32 %s393, 4
          %s404 = int_to_ptr.vmem [resolvable:$true] %s403
          %409 = dma.vmem_to_hbm [thread:$0]  %s404, 256, %s402, %s390, 128, 128, 8
        $region48: #{tpu_custom_call.1} parent=31 // pred_fallthru
          _
      $region32: #{tpu_custom_call.1} parent=5 // pred_fallthru
        _
      %p410 = scmp.le.s32.totalorder 2, %s16
      // Predicated region
      $region49: #{tpu_custom_call.1} parent=5 // pred_check
        %p411 = pneg %p410
      $region50: #{tpu_custom_call.1} parent=5 // pred_check_branch
        %413 = sbr.rel (%p411) target = $region52
      $region51: #{tpu_custom_call.1} parent=5 // pred_region
        %s414 = ssub.s32 %s16, 2
        // Predicated region
        $region53: #{tpu_custom_call.1} parent=51 // pred_check
          %p415 = pneg %p113
        $region54: #{tpu_custom_call.1} parent=51 // pred_check_branch
          %417 = sbr.rel (%p415) target = $region56
        $region55: #{tpu_custom_call.1} parent=51 // pred_region
          %s418 = sand.u32 %s98, 1
          %s419 = scalar_lea.sflag [#allocation4], %s418
          %s420 = sand.u32 %s98, 1
          %s421 = smul.addr %s420, 16
          %s422 = scalar_lea.vmem [#allocation8], %s421
          %423 = dma.done %s419, 256
        $region56: #{tpu_custom_call.1} parent=51 // pred_fallthru
          _
      $region52: #{tpu_custom_call.1} parent=5 // pred_fallthru
        _
    $region6: #{tpu_custom_call.1} parent=1 // loop_footer
      %s20 = sadd.s32 1, %s16
    $region7: #{tpu_custom_call.1} parent=1 // loop_footer_branch
      %15 = sbr.rel target = $region3
    $region8: #{tpu_custom_call.1} parent=1 // loop_exit
      _
    %424 = vsyncpa [#allocation3], 1
    %s425 = scalar_lea.sflag [#allocation3], 1
    %426 = vsyncpa %s425, 1
    %427 = vsyncpa [#allocation6], 1
    %428 = vsyncpa [#allocation4], 1
    %s429 = scalar_lea.sflag [#allocation4], 1
    %430 = vsyncpa %s429, 1

</llo_original>
